<compile_context>
chip_gen: v7x
topology: tpu7x:2x2x1
jax: 0.10.0
libtpu: 0.0.40
codegen_flags: <defaults>
</compile_context>

<pallas_src>
import math

import jax
import jax.numpy as jnp
from jax import lax
from jax.experimental import pallas as pl
from jax.experimental.pallas import tpu as pltpu

LANE = 128          # f32 lane width
MAX_TB = 16384      # VMEM-safety clamp for the batch tile (see header comment)


def _elu(x):
    # ELU(alpha=1): x if x > 0 else exp(x) - 1.
    # exp runs on the EUP (separate bundle slot); no clamp needed — the unselected
    # branch may be +inf but never NaN, and where() discards it.
    return jnp.where(x > 0, x, jnp.exp(x) - 1.0)


def _encoder_kernel(x_ref, w1t_ref, b1_ref, w2t_ref, b2_ref, w3t_ref, b3_ref, o_ref):
    # Shapes (batch-on-lanes activations):
    #   x_ref : [TB, F]  f32   (batch-major tile straight from HBM; F = 2*num_nodes,
    #                           node-0 columns are neutralized by zero weight rows)
    #   w1t   : [H, F]   bf16      b1 : [H, 1] f32
    #   w2t   : [H, H]   bf16      b2 : [H, 1] f32
    #   w3t   : [L, H]   bf16      b3 : [L, 1] f32
    #   o_ref : [L, TB]  f32   (lane-dense output -> unmasked vst)
    xb = x_ref[...].astype(jnp.bfloat16)

    # Layer 1: contract on the feature axis of the batch-major tile (QK^T-style
    # dot_general) -> result lands directly in the [H, TB] batch-on-lanes layout,
    # no materialized transpose of the big operand.
    h = lax.dot_general(w1t_ref[...], xb, (((1,), (1,)), ((), ())),
                        preferred_element_type=jnp.float32)
    h = _elu(h + b1_ref[...]).astype(jnp.bfloat16)

    h = jnp.dot(w2t_ref[...], h, preferred_element_type=jnp.float32)
    h = _elu(h + b2_ref[...]).astype(jnp.bfloat16)

    out = jnp.dot(w3t_ref[...], h, preferred_element_type=jnp.float32) + b3_ref[...]
    o_ref[...] = out.astype(o_ref.dtype)


def _pick_tile(B, block_batch):
    """Batch tile: lane-dense (multiple of 128) when possible, VMEM-safe, and
    split into >= 2 grid tiles when the batch allows (v7x has 2 TensorCores)."""
    if B <= LANE:
        return B                                   # full-extent block (small batch)
    tb = min(block_batch, pl.cdiv(B, LANE) * LANE)
    tb = max(LANE, (tb // LANE) * LANE)
    tb = min(tb, MAX_TB)
    if pl.cdiv(B, tb) < 2:                         # guarantee >= 2 tiles for megacore
        tb = max(LANE, pl.cdiv(pl.cdiv(B, 2), LANE) * LANE)
    return tb


def encoder_u_forward(u, params, *, block_batch=8192):
    """u: [..., num_nodes, 2] float32 -> [..., latent_size] float32."""
    w1, b1, w2, b2, w3, b3 = params
    *lead, num_nodes, two = u.shape
    assert two == 2
    f_in = w1.shape[0]
    hidden = w1.shape[1]
    latent = w3.shape[1]
    assert (num_nodes - 1) * 2 == f_in

    B = math.prod(lead) if lead else 1
    F = num_nodes * 2
    x = u.reshape(B, F)                 # free reshape: no slice / transpose / pad passes

    # Fold the "drop node 0" slice into zero rows of the first weight matrix.
    w1_full = jnp.zeros((F, hidden), jnp.float32).at[2:, :].set(w1)
    w1t = w1_full.T.astype(jnp.bfloat16)            # [H, F]
    w2t = w2.T.astype(jnp.bfloat16)                 # [H, H]
    w3t = w3.T.astype(jnp.bfloat16)                 # [L, H]
    b1c = b1.reshape(hidden, 1).astype(jnp.float32)
    b2c = b2.reshape(hidden, 1).astype(jnp.float32)
    b3c = b3.reshape(latent, 1).astype(jnp.float32)

    tb = _pick_tile(B, block_batch)
    n_tiles = pl.cdiv(B, tb)            # partial last block handled by Pallas masking

    # Weights/biases: same block every grid step -> DMA'd once, VMEM-resident.
    resident = lambda shape: pl.BlockSpec(shape, lambda i: (0, 0))

    cost = pl.CostEstimate(
        flops=2 * B * (F * hidden + hidden * hidden + hidden * latent),
        transcendentals=2 * B * hidden,
        bytes_accessed=4 * B * (F + latent)
        + 2 * (F * hidden + hidden * hidden + hidden * latent)
        + 4 * (2 * hidden + latent),
    )

    out_t = pl.pallas_call(
        _encoder_kernel,
        out_shape=jax.ShapeDtypeStruct((latent, B), jnp.float32),
        grid=(n_tiles,),
        in_specs=[
            pl.BlockSpec((tb, F), lambda i: (i, 0)),   # streamed, pipelined x tile
            resident((hidden, F)),
            resident((hidden, 1)),
            resident((hidden, hidden)),
            resident((hidden, 1)),
            resident((latent, hidden)),
            resident((latent, 1)),
        ],
        out_specs=pl.BlockSpec((latent, tb), lambda i: (0, i)),
        compiler_params=pltpu.CompilerParams(
            dimension_semantics=("parallel",),          # shards across 2 TCs on v7x
            vmem_limit_bytes=32 * 1024 * 1024,          # fits v5e/v6e/v7x
        ),
        cost_estimate=cost,
    )(x, w1t, b1c, w2t, b2c, w3t, b3c)

    # Tiny (32 B/row) layout fix-up; consumers that accept [latent, B] can skip it.
    out = out_t.T
    return out.reshape(tuple(lead) + (latent,))


def init_params(key, num_nodes, latent_size, hidden_size):
    f_in = (num_nodes - 1) * 2
    ks = jax.random.split(key, 6)

    def lin(kw, kb, fan_in, fan_out):
        bound = 1.0 / jnp.sqrt(fan_in)
        w = jax.random.uniform(kw, (fan_in, fan_out), jnp.float32, -bound, bound)
        b = jax.random.uniform(kb, (1, fan_out), jnp.float32, -bound, bound)
        return w, b

    w1, b1 = lin(ks[0], ks[1], f_in, hidden_size)
    w2, b2 = lin(ks[2], ks[3], hidden_size, hidden_size)
    w3, b3 = lin(ks[4], ks[5], hidden_size, latent_size)
    return (w1, b1, w2, b2, w3, b3)


def _reference(u, params, compute_dtype=jnp.float32):
    """Pure-JAX reference. compute_dtype=bf16 mirrors the kernel's operand casts."""
    w1, b1, w2, b2, w3, b3 = params
    x = u[..., 1:, :].reshape(u.shape[:-2] + (-1,))

    def lin(h, w, b):
        return jnp.dot(h.astype(compute_dtype), w.astype(compute_dtype),
                       preferred_element_type=jnp.float32) + b

    elu = lambda v: jnp.where(v > 0, v, jnp.exp(jnp.minimum(v, 0.0)) - 1.0)
    h = elu(lin(x, w1, b1))
    h = elu(lin(h, w2, b2))
    return lin(h, w3, b3)


if __name__ == "__main__":
    num_nodes = 10       # matches linspace(0, 1, 10) in the module's u0()
    latent_size = 8
    hidden_size = 32
    batch = 2

    key = jax.random.PRNGKey(0)
    k_u, k_p = jax.random.split(key)
    u = jax.random.normal(k_u, (batch, num_nodes, 2), dtype=jnp.float32)
    params = init_params(k_p, num_nodes, latent_size, hidden_size)

    out = jax.block_until_ready(encoder_u_forward(u, params))
    assert out.shape == (batch, latent_size)
    ref_b = _reference(u, params, jnp.bfloat16)   # same bf16 quantization as kernel
    ref_f = _reference(u, params, jnp.float32)    # true f32 semantics
    assert jnp.allclose(out, ref_b, atol=1e-4, rtol=1e-4), "mismatch vs bf16-matched ref"
    assert jnp.allclose(out, ref_f, atol=1e-1, rtol=1e-1), "mismatch vs f32 reference"

    # Multi-tile + partial-final-block path (3 grid steps, last block only 7 valid rows).
    big_b = 2 * 1024 + 7
    u_big = jax.random.normal(jax.random.PRNGKey(1), (big_b, num_nodes, 2),
                              dtype=jnp.float32)
    out_big = jax.block_until_ready(
        encoder_u_forward(u_big, params, block_batch=1024))
    ref_big = _reference(u_big, params, jnp.bfloat16)
    assert out_big.shape == (big_b, latent_size)
    assert jnp.allclose(out_big, ref_big, atol=2e-4, rtol=2e-4), "mismatch (big batch)"

    print("KERNEL_OK")
</pallas_src>

<mosaic_0001>
module attributes {stable_mosaic.version = 11 : i64} {
  func.func @_encoder_kernel(%arg0: i32, %arg1: memref<2x20xf32, #tpu.memory_space<vmem>>, %arg2: memref<32x20xbf16, #tpu.memory_space<vmem>>, %arg3: memref<32x1xf32, #tpu.memory_space<vmem>>, %arg4: memref<32x32xbf16, #tpu.memory_space<vmem>>, %arg5: memref<32x1xf32, #tpu.memory_space<vmem>>, %arg6: memref<8x32xbf16, #tpu.memory_space<vmem>>, %arg7: memref<8x1xf32, #tpu.memory_space<vmem>>, %arg8: memref<8x2xf32, #tpu.memory_space<vmem>>) attributes {dimension_semantics = [#tpu.dimension_semantics<parallel>], iteration_bounds = array<i64: 1>, scalar_prefetch = 0 : i64, scratch_operands = 0 : i64, tpu.core_type = #tpu.core_type<tc>, window_params = [{transform_indices = @transform_0, window_bounds = array<i64: 2, 20>}, {pipeline_mode = #tpu.pipeline_mode<synchronous>, transform_indices = @transform_1, window_bounds = array<i64: 32, 20>}, {pipeline_mode = #tpu.pipeline_mode<synchronous>, transform_indices = @transform_2, window_bounds = array<i64: 32, 1>}, {pipeline_mode = #tpu.pipeline_mode<synchronous>, transform_indices = @transform_3, window_bounds = array<i64: 32, 32>}, {pipeline_mode = #tpu.pipeline_mode<synchronous>, transform_indices = @transform_4, window_bounds = array<i64: 32, 1>}, {pipeline_mode = #tpu.pipeline_mode<synchronous>, transform_indices = @transform_5, window_bounds = array<i64: 8, 32>}, {pipeline_mode = #tpu.pipeline_mode<synchronous>, transform_indices = @transform_6, window_bounds = array<i64: 8, 1>}, {transform_indices = @transform_7, window_bounds = array<i64: 8, 2>}]} {
    %c0 = arith.constant 0 : index
    %c0_0 = arith.constant 0 : index
    %0 = vector.load %arg1[%c0, %c0_0] : memref<2x20xf32, #tpu.memory_space<vmem>>, vector<2x20xf32>
    %1 = arith.truncf %0 : vector<2x20xf32> to vector<2x20xbf16>
    %c0_1 = arith.constant 0 : index
    %c0_2 = arith.constant 0 : index
    %2 = vector.load %arg2[%c0_1, %c0_2] : memref<32x20xbf16, #tpu.memory_space<vmem>>, vector<32x20xbf16>
    %cst = arith.constant dense<0.000000e+00> : vector<32x2xf32>
    %3 = tpu.matmul %2, %1, %cst {dimension_numbers = #tpu.dot_dimension_numbers<[1], [1], [0], [0], [0, 0, 1, 0], [], []>} : vector<32x20xbf16>, vector<2x20xbf16>, vector<32x2xf32> -> vector<32x2xf32>
    %c0_3 = arith.constant 0 : index
    %c0_4 = arith.constant 0 : index
    %4 = vector.load %arg3[%c0_3, %c0_4] : memref<32x1xf32, #tpu.memory_space<vmem>>, vector<32x1xf32>
    %5 = vector.broadcast %4 : vector<32x1xf32> to vector<32x2xf32>
    %6 = arith.addf %3, %5 : vector<32x2xf32>
    %cst_5 = arith.constant 0.000000e+00 : f32
    %7 = vector.broadcast %cst_5 : f32 to vector<32x2xf32>
    %8 = arith.cmpf ogt, %6, %7 : vector<32x2xf32>
    %9 = math.exp %6 : vector<32x2xf32>
    %cst_6 = arith.constant 1.000000e+00 : f32
    %10 = vector.broadcast %cst_6 : f32 to vector<32x2xf32>
    %11 = arith.subf %9, %10 : vector<32x2xf32>
    %12 = arith.select %8, %6, %11 : vector<32x2xi1>, vector<32x2xf32>
    %13 = arith.truncf %12 : vector<32x2xf32> to vector<32x2xbf16>
    %c0_7 = arith.constant 0 : index
    %c0_8 = arith.constant 0 : index
    %14 = vector.load %arg4[%c0_7, %c0_8] : memref<32x32xbf16, #tpu.memory_space<vmem>>, vector<32x32xbf16>
    %cst_9 = arith.constant dense<0.000000e+00> : vector<32x2xf32>
    %15 = tpu.matmul %14, %13, %cst_9 {dimension_numbers = #tpu.dot_dimension_numbers<[1], [0], [0], [1], [0, 0, 1, 1], [], []>} : vector<32x32xbf16>, vector<32x2xbf16>, vector<32x2xf32> -> vector<32x2xf32>
    %c0_10 = arith.constant 0 : index
    %c0_11 = arith.constant 0 : index
    %16 = vector.load %arg5[%c0_10, %c0_11] : memref<32x1xf32, #tpu.memory_space<vmem>>, vector<32x1xf32>
    %17 = vector.broadcast %16 : vector<32x1xf32> to vector<32x2xf32>
    %18 = arith.addf %15, %17 : vector<32x2xf32>
    %cst_12 = arith.constant 0.000000e+00 : f32
    %19 = vector.broadcast %cst_12 : f32 to vector<32x2xf32>
    %20 = arith.cmpf ogt, %18, %19 : vector<32x2xf32>
    %21 = math.exp %18 : vector<32x2xf32>
    %cst_13 = arith.constant 1.000000e+00 : f32
    %22 = vector.broadcast %cst_13 : f32 to vector<32x2xf32>
    %23 = arith.subf %21, %22 : vector<32x2xf32>
    %24 = arith.select %20, %18, %23 : vector<32x2xi1>, vector<32x2xf32>
    %25 = arith.truncf %24 : vector<32x2xf32> to vector<32x2xbf16>
    %c0_14 = arith.constant 0 : index
    %c0_15 = arith.constant 0 : index
    %26 = vector.load %arg6[%c0_14, %c0_15] : memref<8x32xbf16, #tpu.memory_space<vmem>>, vector<8x32xbf16>
    %cst_16 = arith.constant dense<0.000000e+00> : vector<8x2xf32>
    %27 = tpu.matmul %26, %25, %cst_16 {dimension_numbers = #tpu.dot_dimension_numbers<[1], [0], [0], [1], [0, 0, 1, 1], [], []>} : vector<8x32xbf16>, vector<32x2xbf16>, vector<8x2xf32> -> vector<8x2xf32>
    %c0_17 = arith.constant 0 : index
    %c0_18 = arith.constant 0 : index
    %28 = vector.load %arg7[%c0_17, %c0_18] : memref<8x1xf32, #tpu.memory_space<vmem>>, vector<8x1xf32>
    %29 = vector.broadcast %28 : vector<8x1xf32> to vector<8x2xf32>
    %30 = arith.addf %27, %29 : vector<8x2xf32>
    %c0_19 = arith.constant 0 : index
    %c0_20 = arith.constant 0 : index
    %31 = vector.load %arg8[%c0_19, %c0_20] : memref<8x2xf32, #tpu.memory_space<vmem>>, vector<8x2xf32>
    tpu.vector_store %arg8[%c0_19, %c0_20], %30 {strides = array<i32>} : memref<8x2xf32, #tpu.memory_space<vmem>>, vector<8x2xf32>,
    return
  }
  func.func @transform_0(%arg0: i32) -> (i32, i32) {
    %c0_i32 = arith.constant 0 : i32
    %c0_i32_0 = arith.constant 0 : i32
    return %arg0, %c0_i32 : i32, i32
  }
  func.func @transform_1(%arg0: i32) -> (i32, i32) {
    %c0_i32 = arith.constant 0 : i32
    %c0_i32_0 = arith.constant 0 : i32
    %c0_i32_1 = arith.constant 0 : i32
    return %c0_i32, %c0_i32_0 : i32, i32
  }
  func.func @transform_2(%arg0: i32) -> (i32, i32) {
    %c0_i32 = arith.constant 0 : i32
    %c0_i32_0 = arith.constant 0 : i32
    %c0_i32_1 = arith.constant 0 : i32
    return %c0_i32, %c0_i32_0 : i32, i32
  }
  func.func @transform_3(%arg0: i32) -> (i32, i32) {
    %c0_i32 = arith.constant 0 : i32
    %c0_i32_0 = arith.constant 0 : i32
    %c0_i32_1 = arith.constant 0 : i32
    return %c0_i32, %c0_i32_0 : i32, i32
  }
  func.func @transform_4(%arg0: i32) -> (i32, i32) {
    %c0_i32 = arith.constant 0 : i32
    %c0_i32_0 = arith.constant 0 : i32
    %c0_i32_1 = arith.constant 0 : i32
    return %c0_i32, %c0_i32_0 : i32, i32
  }
  func.func @transform_5(%arg0: i32) -> (i32, i32) {
    %c0_i32 = arith.constant 0 : i32
    %c0_i32_0 = arith.constant 0 : i32
    %c0_i32_1 = arith.constant 0 : i32
    return %c0_i32, %c0_i32_0 : i32, i32
  }
  func.func @transform_6(%arg0: i32) -> (i32, i32) {
    %c0_i32 = arith.constant 0 : i32
    %c0_i32_0 = arith.constant 0 : i32
    %c0_i32_1 = arith.constant 0 : i32
    return %c0_i32, %c0_i32_0 : i32, i32
  }
  func.func @transform_7(%arg0: i32) -> (i32, i32) {
    %c0_i32 = arith.constant 0 : i32
    %c0_i32_0 = arith.constant 0 : i32
    return %c0_i32, %arg0 : i32, i32
  }
}

</mosaic_0001>

<llo_original>
// kernel: tpu_custom_call.1
$region0: #{tpu_custom_call.1}
  #allocation0 [shape = 'u32[]', space=smem, size = 0x4, offset = 0x4, fixed_abs, tag = 'smem constant byte address 0x4 - core index']
  #allocation1 [shape = 'u32[144,128]{1,0:T(1,128)}', space=vmem, size = 0x12000, scoped, tag = 'internal scratch']
  %s0 = inlined_call_operand.vmem [shape: f32[2,20], index: 0, kind: input, shape index: {}]
  %s1 = inlined_call_operand.vmem [shape: bf16[32,20], index: 1, kind: input, shape index: {}]
  %s2 = inlined_call_operand.vmem [shape: f32[32,1], index: 2, kind: input, shape index: {}]
  %s3 = inlined_call_operand.vmem [shape: bf16[32,32], index: 3, kind: input, shape index: {}]
  %s4 = inlined_call_operand.vmem [shape: f32[32,1], index: 4, kind: input, shape index: {}]
  %s5 = inlined_call_operand.vmem [shape: bf16[8,32], index: 5, kind: input, shape index: {}]
  %s6 = inlined_call_operand.vmem [shape: f32[8,1], index: 6, kind: input, shape index: {}]
  %s7 = inlined_call_operand.vmem [shape: f32[8,2], index: 7, kind: output, shape index: {}]
  %s8 = sld [smem:[#allocation0]]
  $region38: #{tpu_custom_call.1} parent=0
    _
  %s10 = ssub.s32 1, %s8
  %s11 = scalar_select 0, %s10, %s8
  // Predicated region
  $region2: #{tpu_custom_call.1} parent=0 // pred_check
    _
  $region3: #{tpu_custom_call.1} parent=0 // pred_check_branch
    %13 = sbr.rel (0) target = $region5
  $region4: #{tpu_custom_call.1} parent=0 // pred_region
    _
  $region5: #{tpu_custom_call.1} parent=0 // pred_fallthru
    _
  // Predicated region
  $region6: #{tpu_custom_call.1} parent=0 // pred_check
    _
  $region7: #{tpu_custom_call.1} parent=0 // pred_check_branch
    %15 = sbr.rel (0) target = $region9
  $region8: #{tpu_custom_call.1} parent=0 // pred_region
    _
  $region9: #{tpu_custom_call.1} parent=0 // pred_fallthru
    _
  // Predicated region
  $region10: #{tpu_custom_call.1} parent=0 // pred_check
    _
  $region11: #{tpu_custom_call.1} parent=0 // pred_check_branch
    %17 = sbr.rel (0) target = $region13
  $region12: #{tpu_custom_call.1} parent=0 // pred_region
    _
  $region13: #{tpu_custom_call.1} parent=0 // pred_fallthru
    _
  // Predicated region
  $region14: #{tpu_custom_call.1} parent=0 // pred_check
    _
  $region15: #{tpu_custom_call.1} parent=0 // pred_check_branch
    %19 = sbr.rel (0) target = $region17
  $region16: #{tpu_custom_call.1} parent=0 // pred_region
    _
  $region17: #{tpu_custom_call.1} parent=0 // pred_fallthru
    _
  // Predicated region
  $region18: #{tpu_custom_call.1} parent=0 // pred_check
    _
  $region19: #{tpu_custom_call.1} parent=0 // pred_check_branch
    %21 = sbr.rel (0) target = $region21
  $region20: #{tpu_custom_call.1} parent=0 // pred_region
    _
  $region21: #{tpu_custom_call.1} parent=0 // pred_fallthru
    _
  // Predicated region
  $region22: #{tpu_custom_call.1} parent=0 // pred_check
    _
  $region23: #{tpu_custom_call.1} parent=0 // pred_check_branch
    %23 = sbr.rel (0) target = $region25
  $region24: #{tpu_custom_call.1} parent=0 // pred_region
    _
  $region25: #{tpu_custom_call.1} parent=0 // pred_fallthru
    _
  // Predicated region
  $region26: #{tpu_custom_call.1} parent=0 // pred_check
    _
  $region27: #{tpu_custom_call.1} parent=0 // pred_check_branch
    %25 = sbr.rel (0) target = $region29
  $region28: #{tpu_custom_call.1} parent=0 // pred_region
    _
  $region29: #{tpu_custom_call.1} parent=0 // pred_fallthru
    _
  %v27 = vld [vmem:[%s0] sm:$0x3]
  %v28 = vpack.c.bf16 %v27, %v27
  %v29 = vld [vmem:[%s1] sm:$0xf]
  %v30 = vld [vmem:[%s1 + $0x4] sm:$0xf]
  %v31 = vld [vmem:[%s1 + $0x8] sm:$0xf]
  %v32 = vld [vmem:[%s1 + $0xc] sm:$0xf]
  %v33 = vld [vmem:[%s2] sm:$0xff]
  %v34 = vld [vmem:[%s2 + $0x8] sm:$0xff]
  %v35 = vld [vmem:[%s2 + $0x10] sm:$0xff]
  %v36 = vld [vmem:[%s2 + $0x18] sm:$0xff]
  %38 = vset.pattern.permute.xlu0 0
  %39 = vperm.xlu0 %38, %v33
  %v40 = vpop.permute.xlu0 %39
  %43 = vset.pattern.permute.xlu0 0
  %44 = vperm.xlu0 %43, %v34
  %v45 = vpop.permute.xlu0 %44
  %48 = vset.pattern.permute.xlu0 0
  %49 = vperm.xlu0 %48, %v35
  %v50 = vpop.permute.xlu0 %49
  %53 = vset.pattern.permute.xlu0 0
  %54 = vperm.xlu0 %53, %v36
  %v55 = vpop.permute.xlu0 %54
  %v61 = vunpack.c.l.b16 %v29
  %v62 = vunpack.c.l.b16 %v30
  %v63 = vunpack.c.l.b16 %v31
  %v64 = vunpack.c.l.b16 %v32
  %v65 = vpack.c.b16 %v62, %v61
  %v66 = vpack.c.b16 %v64, %v63
  %vm67 = vcmask 162816
  %v69 = vsel %vm67, %v65, 0
  %v72 = vsel %vm67, %v66, 0
  %v75 = vsel %vm67, %v28, 0
  %77 = vmatprep.subr.bf16.mxu0 0
  %78 = vmatpush1.bf16.xpose.msra.mxu0 %v75
  %79 = vmatprep.subr.bf16.mxu0 0
  %80 = vmatpush1.bf16.xpose.msra.mxu0 0
  %81 = vmatprep.subr.bf16.mxu0 0
  %82 = vmatpush1.bf16.xpose.msra.mxu0 0
  %83 = vmatprep.subr.bf16.mxu0 0
  %84 = vmatpush1.bf16.xpose.msra.mxu0 0
  %85 = vmatprep.subr.bf16.mxu0 0
  %86 = vmatpush1.bf16.xpose.msra.mxu0 0
  %87 = vmatprep.subr.bf16.mxu0 0
  %88 = vmatpush1.bf16.xpose.msra.mxu0 0
  %89 = vmatprep.subr.bf16.mxu0 0
  %90 = vmatpush1.bf16.xpose.msra.mxu0 0
  %91 = vmatprep.subr.bf16.mxu0 0
  %92 = vmatpush1.bf16.xpose.msra.mxu0 0
  %93 = vmatprep.subr.bf16.mxu0 0
  %94 = vmatpush1.bf16.xpose.msra.mxu0 0
  %95 = vmatprep.subr.bf16.mxu0 0
  %96 = vmatpush1.bf16.xpose.msra.mxu0 0
  %97 = vmatprep.subr.bf16.mxu0 0
  %98 = vmatpush1.bf16.xpose.msra.mxu0 0
  %99 = vmatprep.subr.bf16.mxu0 0
  %100 = vmatpush1.bf16.xpose.msra.mxu0 0
  %101 = vmatprep.subr.bf16.mxu0 0
  %102 = vmatpush1.bf16.xpose.msra.mxu0 0
  %103 = vmatprep.subr.bf16.mxu0 0
  %104 = vmatpush1.bf16.xpose.msra.mxu0 0
  %105 = vmatprep.subr.bf16.mxu0 0
  %106 = vmatpush1.bf16.xpose.msra.mxu0 0
  %107 = vmatprep.subr.bf16.mxu0 0
  %108 = vmatpush1.bf16.xpose.msra.mxu0 0
  %109 = vmatprep.mubr.bf16.mxu0 0
  %110 = vmatmul.mubr.bf16.gmra.mrb[0].mxu0 %v69
  %v111 = vpop.f32.mrb[0].mxu0
  %v112 = vadd.f32 %v40, %v111
  %v113 = vpop.f32.mrb[0].mxu0
  %v114 = vpop.f32.mrb[0].mxu0
  %v115 = vadd.f32 %v45, %v114
  %v116 = vpop.f32.mrb[0].mxu0
  %117 = vmatprep.mubr.bf16.mxu0 0
  %118 = vmatmul.mubr.bf16.gmra.mrb[0].mxu0 %v72
  %v119 = vpop.f32.mrb[0].mxu0
  %v120 = vadd.f32 %v50, %v119
  %v121 = vpop.f32.mrb[0].mxu0
  %v122 = vpop.f32.mrb[0].mxu0
  %v123 = vadd.f32 %v55, %v122
  %v124 = vpop.f32.mrb[0].mxu0
  %125 = vdwg.mxu0
  %vm126 = vcmp.gt.f32.partialorder %v112, 0.0
  %vm127 = vcmp.gt.f32.partialorder %v115, 0.0
  %vm128 = vcmp.gt.f32.partialorder %v120, 0.0
  %vm129 = vcmp.gt.f32.partialorder %v123, 0.0
  %v130 = vmul.f32 %v112, 1.442695
  %v131 = vpow.pop %v130
  %v132 = vmul.f32 %v115, 1.442695
  %v133 = vpow.pop %v132
  %v134 = vmul.f32 %v120, 1.442695
  %v135 = vpow.pop %v134
  %v136 = vmul.f32 %v123, 1.442695
  %v137 = vpow.pop %v136
  %v138 = vsub.f32 %v131, 1.0
  %v139 = vsub.f32 %v133, 1.0
  %v140 = vsub.f32 %v135, 1.0
  %v141 = vsub.f32 %v137, 1.0
  %v142 = vsel %vm126, %v112, %v138
  %v143 = vsel %vm127, %v115, %v139
  %v144 = vsel %vm128, %v120, %v140
  %v145 = vsel %vm129, %v123, %v141
  %v146 = vpack.c.bf16 %v143, %v142
  %v147 = vpack.c.bf16 %v145, %v144
  %v148 = vld [vmem:[%s3] sm:$0xf]
  %v149 = vld [vmem:[%s3 + $0x4] sm:$0xf]
  %v150 = vld [vmem:[%s3 + $0x8] sm:$0xf]
  %v151 = vld [vmem:[%s3 + $0xc] sm:$0xf]
  %v152 = vld [vmem:[%s4] sm:$0xff]
  %v153 = vld [vmem:[%s4 + $0x8] sm:$0xff]
  %v154 = vld [vmem:[%s4 + $0x10] sm:$0xff]
  %v155 = vld [vmem:[%s4 + $0x18] sm:$0xff]
  %157 = vset.pattern.permute.xlu0 0
  %158 = vperm.xlu0 %157, %v152
  %v159 = vpop.permute.xlu0 %158
  %162 = vset.pattern.permute.xlu0 0
  %163 = vperm.xlu0 %162, %v153
  %v164 = vpop.permute.xlu0 %163
  %167 = vset.pattern.permute.xlu0 0
  %168 = vperm.xlu0 %167, %v154
  %v169 = vpop.permute.xlu0 %168
  %172 = vset.pattern.permute.xlu0 0
  %173 = vperm.xlu0 %172, %v155
  %v174 = vpop.permute.xlu0 %173
  %v180 = vunpack.c.l.b16 %v148
  %v181 = vunpack.c.l.b16 %v149
  %v182 = vunpack.c.l.b16 %v150
  %v183 = vunpack.c.l.b16 %v151
  %v184 = vpack.c.b16 %v181, %v180
  %v185 = vpack.c.b16 %v183, %v182
  %vm186 = vcmask 261120
  %v188 = vsel %vm186, %v184, 0
  %v191 = vsel %vm186, %v185, 0
  %193 = vmatprep.subr.bf16.mxu0 0
  %194 = vmatpush1.bf16.msra.mxu0 %v146
  %195 = vmatprep.subr.bf16.mxu0 0
  %196 = vmatpush1.bf16.msra.mxu0 %v147
  %197 = vmatprep.subr.bf16.mxu0 0
  %198 = vmatpush1.bf16.msra.mxu0 0
  %199 = vmatprep.subr.bf16.mxu0 0
  %200 = vmatpush1.bf16.msra.mxu0 0
  %201 = vmatprep.subr.bf16.mxu0 0
  %202 = vmatpush1.bf16.msra.mxu0 0
  %203 = vmatprep.subr.bf16.mxu0 0
  %204 = vmatpush1.bf16.msra.mxu0 0
  %205 = vmatprep.subr.bf16.mxu0 0
  %206 = vmatpush1.bf16.msra.mxu0 0
  %207 = vmatprep.subr.bf16.mxu0 0
  %208 = vmatpush1.bf16.msra.mxu0 0
  %209 = vmatprep.subr.bf16.mxu0 0
  %210 = vmatpush1.bf16.msra.mxu0 0
  %211 = vmatprep.subr.bf16.mxu0 0
  %212 = vmatpush1.bf16.msra.mxu0 0
  %213 = vmatprep.subr.bf16.mxu0 0
  %214 = vmatpush1.bf16.msra.mxu0 0
  %215 = vmatprep.subr.bf16.mxu0 0
  %216 = vmatpush1.bf16.msra.mxu0 0
  %217 = vmatprep.subr.bf16.mxu0 0
  %218 = vmatpush1.bf16.msra.mxu0 0
  %219 = vmatprep.subr.bf16.mxu0 0
  %220 = vmatpush1.bf16.msra.mxu0 0
  %221 = vmatprep.subr.bf16.mxu0 0
  %222 = vmatpush1.bf16.msra.mxu0 0
  %223 = vmatprep.subr.bf16.mxu0 0
  %224 = vmatpush1.bf16.msra.mxu0 0
  %225 = vmatprep.mubr.bf16.mxu0 0
  %226 = vmatmul.mubr.bf16.gmra.mrb[0].mxu0 %v188
  %v227 = vpop.f32.mrb[0].mxu0
  %v228 = vadd.f32 %v159, %v227
  %v229 = vpop.f32.mrb[0].mxu0
  %v230 = vpop.f32.mrb[0].mxu0
  %v231 = vadd.f32 %v164, %v230
  %v232 = vpop.f32.mrb[0].mxu0
  %233 = vmatprep.mubr.bf16.mxu0 0
  %234 = vmatmul.mubr.bf16.gmra.mrb[0].mxu0 %v191
  %v235 = vpop.f32.mrb[0].mxu0
  %v236 = vadd.f32 %v169, %v235
  %v237 = vpop.f32.mrb[0].mxu0
  %v238 = vpop.f32.mrb[0].mxu0
  %v239 = vadd.f32 %v174, %v238
  %v240 = vpop.f32.mrb[0].mxu0
  %241 = vdwg.mxu0
  %vm242 = vcmp.gt.f32.partialorder %v228, 0.0
  %vm243 = vcmp.gt.f32.partialorder %v231, 0.0
  %vm244 = vcmp.gt.f32.partialorder %v236, 0.0
  %vm245 = vcmp.gt.f32.partialorder %v239, 0.0
  %v246 = vmul.f32 %v228, 1.442695
  %v247 = vpow.pop %v246
  %v248 = vmul.f32 %v231, 1.442695
  %v249 = vpow.pop %v248
  %v250 = vmul.f32 %v236, 1.442695
  %v251 = vpow.pop %v250
  %v252 = vmul.f32 %v239, 1.442695
  %v253 = vpow.pop %v252
  %v254 = vsub.f32 %v247, 1.0
  %v255 = vsub.f32 %v249, 1.0
  %v256 = vsub.f32 %v251, 1.0
  %v257 = vsub.f32 %v253, 1.0
  %v258 = vsel %vm242, %v228, %v254
  %v259 = vsel %vm243, %v231, %v255
  %v260 = vsel %vm244, %v236, %v256
  %v261 = vsel %vm245, %v239, %v257
  %v262 = vpack.c.bf16 %v259, %v258
  %v263 = vpack.c.bf16 %v261, %v260
  %v264 = vld [vmem:[%s5] sm:$0xf]
  %v265 = vld [vmem:[%s6] sm:$0xff]
  %267 = vset.pattern.permute.xlu0 0
  %268 = vperm.xlu0 %267, %v265
  %v269 = vpop.permute.xlu0 %268
  %v272 = vsel %vm186, %v264, 0
  %274 = vmatprep.subr.bf16.mxu0 0
  %275 = vmatpush1.bf16.msra.mxu0 %v262
  %276 = vmatprep.subr.bf16.mxu0 0
  %277 = vmatpush1.bf16.msra.mxu0 %v263
  %278 = vmatprep.subr.bf16.mxu0 0
  %279 = vmatpush1.bf16.msra.mxu0 0
  %280 = vmatprep.subr.bf16.mxu0 0
  %281 = vmatpush1.bf16.msra.mxu0 0
  %282 = vmatprep.subr.bf16.mxu0 0
  %283 = vmatpush1.bf16.msra.mxu0 0
  %284 = vmatprep.subr.bf16.mxu0 0
  %285 = vmatpush1.bf16.msra.mxu0 0
  %286 = vmatprep.subr.bf16.mxu0 0
  %287 = vmatpush1.bf16.msra.mxu0 0
  %288 = vmatprep.subr.bf16.mxu0 0
  %289 = vmatpush1.bf16.msra.mxu0 0
  %290 = vmatprep.subr.bf16.mxu0 0
  %291 = vmatpush1.bf16.msra.mxu0 0
  %292 = vmatprep.subr.bf16.mxu0 0
  %293 = vmatpush1.bf16.msra.mxu0 0
  %294 = vmatprep.subr.bf16.mxu0 0
  %295 = vmatpush1.bf16.msra.mxu0 0
  %296 = vmatprep.subr.bf16.mxu0 0
  %297 = vmatpush1.bf16.msra.mxu0 0
  %298 = vmatprep.subr.bf16.mxu0 0
  %299 = vmatpush1.bf16.msra.mxu0 0
  %300 = vmatprep.subr.bf16.mxu0 0
  %301 = vmatpush1.bf16.msra.mxu0 0
  %302 = vmatprep.subr.bf16.mxu0 0
  %303 = vmatpush1.bf16.msra.mxu0 0
  %304 = vmatprep.subr.bf16.mxu0 0
  %305 = vmatpush1.bf16.msra.mxu0 0
  %306 = vmatprep.mubr.bf16.mxu0 0
  %307 = vmatmul.mubr.bf16.gmra.mrb[0].mxu0 %v272
  %v308 = vpop.f32.mrb[0].mxu0
  %v309 = vadd.f32 %v269, %v308
  %v310 = vpop.f32.mrb[0].mxu0
  %v311 = vpop.f32.mrb[0].mxu0
  %v312 = vpop.f32.mrb[0].mxu0
  %313 = vdwg.mxu0
  %vm314 = vcmask 15360
  %315 = vst.msk [vmem:[%s7] sm:$0xff] %vm314, %v309
  // Predicated region
  $region30: #{tpu_custom_call.1} parent=0 // pred_check
    _
  $region31: #{tpu_custom_call.1} parent=0 // pred_check_branch
    %317 = sbr.rel (0) target = $region33
  $region32: #{tpu_custom_call.1} parent=0 // pred_region
    _
  $region33: #{tpu_custom_call.1} parent=0 // pred_fallthru
    _
  // Predicated region
  $region34: #{tpu_custom_call.1} parent=0 // pred_check
    _
  $region35: #{tpu_custom_call.1} parent=0 // pred_check_branch
    %319 = sbr.rel (0) target = $region37
  $region36: #{tpu_custom_call.1} parent=0 // pred_region
    _
  $region37: #{tpu_custom_call.1} parent=0 // pred_fallthru
    _

</llo_original>
